<compile_context>
chip_gen: v5e
topology: v5e:2x2
jax: 0.10.0
libtpu: 0.0.40
codegen_flags: <defaults>
</compile_context>

<pallas_src>
import functools

import jax
import jax.numpy as jnp
from jax.experimental import pallas as pl
from jax.experimental.pallas import tpu as pltpu

LANES = 128


def _round_up(x, m):
    return ((x + m - 1) // m) * m


def _max_tile_rows():
    # v7x: higher HBM bandwidth makes the fixed per-grid-step overhead a larger
    # fraction of step time, so a bigger tile pays; v5e/v6e keep 512 (fits the
    # v5e 16 MiB scoped-VMEM default with the f32 x tile double-buffered).
    try:
        if "7" in jax.devices()[0].device_kind:
            return 1024
    except Exception:
        pass
    return 512


def _linear_kernel(x_ref, w_ref, b_ref, o_ref):
    # x_ref: (TB, D) f32 (streamed)   w_ref: (D, NP) bf16 (resident)
    # b_ref: (1, NP) f32 (resident)   o_ref: (TB, NP) bf16
    x = x_ref[...].astype(jnp.bfloat16)          # VPU cast, free under the DMA
    acc = jnp.dot(x, w_ref[...], preferred_element_type=jnp.float32)
    o_ref[...] = (acc + b_ref[...]).astype(o_ref.dtype)


def pack_params(w_t, b):
    """Pack nn.Linear params ONCE at init: bf16 weight / f32 bias, lane-padded to 128."""
    D, N = w_t.shape
    NP = _round_up(N, LANES)
    w_packed = jnp.pad(w_t.astype(jnp.bfloat16), ((0, 0), (0, NP - N)))
    b_packed = jnp.pad(b.astype(jnp.float32), ((0, NP - N),)).reshape(1, NP)
    return w_packed, b_packed


@functools.partial(jax.jit, static_argnames=("num_classes", "return_embeddings"))
def linear_classifier_forward(features, w_packed, b_packed, *,
                              num_classes=5, return_embeddings=False):
    """Pallas implementation of LinearClassifier.forward.

    features: (B, D) f32
    w_packed: (D, NP) bf16  lane-padded transposed weight (from pack_params)
    b_packed: (1, NP) f32   lane-padded bias             (from pack_params)
    """
    if return_embeddings:
        return features

    B, D = features.shape
    Dw, NP = w_packed.shape
    assert D == Dw and NP % LANES == 0 and num_classes <= NP

    # Batch tile: >=2 grid steps whenever B allows (so "parallel" can shard the
    # batch over both v7x TensorCores), capped per-chip generation.
    TB = min(_max_tile_rows(), max(8, _round_up(pl.cdiv(B, 2), 8)))
    n_tiles = pl.cdiv(B, TB)           # ragged last tile handled by Pallas

    bytes_accessed = (
        B * D * features.dtype.itemsize        # x: single f32 pass (dominant)
        + D * NP * w_packed.dtype.itemsize     # resident bf16 weight, fetched once
        + NP * b_packed.dtype.itemsize         # bias
        + B * NP * 2                           # bf16 output slab
    )

    out = pl.pallas_call(
        _linear_kernel,
        out_shape=jax.ShapeDtypeStruct((B, NP), jnp.bfloat16),
        grid=(n_tiles,),
        in_specs=[
            pl.BlockSpec((TB, D), lambda i: (i, 0)),   # per-step f32 x tile
            pl.BlockSpec((D, NP), lambda i: (0, 0)),   # weight: resident
            pl.BlockSpec((1, NP), lambda i: (0, 0)),   # bias:   resident
        ],
        out_specs=pl.BlockSpec((TB, NP), lambda i: (i, 0)),
        compiler_params=pltpu.CompilerParams(
            dimension_semantics=("parallel",),         # v7x: split batch over 2 TCs
        ),
        cost_estimate=pl.CostEstimate(
            flops=2 * B * D * NP,
            transcendentals=0,
            bytes_accessed=bytes_accessed,
        ),
    )(features, w_packed, b_packed)

    # Strip the lane padding of the logits (lanes num_classes..127 are exact zeros).
    return out[:, :num_classes].astype(features.dtype)


def init_params(key, input_dim=1792, num_classes=5):
    """Deterministic synthetic init matching nn.Linear's shapes/init scheme."""
    kw, kb = jax.random.split(key)
    bound = 1.0 / (input_dim ** 0.5)
    # PyTorch stores weight as (num_classes, input_dim); we keep it transposed.
    w_t = jax.random.uniform(
        kw, (input_dim, num_classes), jnp.float32, minval=-bound, maxval=bound
    )
    b = jax.random.uniform(
        kb, (num_classes,), jnp.float32, minval=-bound, maxval=bound
    )
    return w_t, b


def _reference(features, w_t, b):
    # Reference mirroring the kernel's numerics: bf16 operands, f32 accumulate,
    # bf16 output slab cast back to f32.
    xq = features.astype(jnp.bfloat16)
    wq = w_t.astype(jnp.bfloat16)
    logits = jnp.dot(xq, wq, preferred_element_type=jnp.float32) + b
    return logits.astype(jnp.bfloat16).astype(jnp.float32)


if __name__ == "__main__":
    key = jax.random.PRNGKey(0)
    k_feat, k_feat2, k_param = jax.random.split(key, 3)

    input_dim = 1792
    num_classes = 5
    w_t, b = init_params(k_param, input_dim, num_classes)
    w_packed, b_packed = pack_params(w_t, b)      # packed once at init

    # --- Small production-like batch (single tile) ---------------------------
    batch = 8
    features = jax.random.normal(k_feat, (batch, input_dim), jnp.float32)
    out = jax.block_until_ready(
        linear_classifier_forward(features, w_packed, b_packed,
                                  num_classes=num_classes))
    ref = _reference(features, w_t, b)
    assert out.shape == (batch, num_classes)
    assert jnp.allclose(out, ref, atol=1e-2, rtol=1e-2), (
        float(jnp.max(jnp.abs(out - ref))))

    # --- Larger batch: multi-tile "parallel" grid + ragged last tile ---------
    batch2 = 300
    features2 = jax.random.normal(k_feat2, (batch2, input_dim), jnp.float32)
    out2 = jax.block_until_ready(
        linear_classifier_forward(features2, w_packed, b_packed,
                                  num_classes=num_classes))
    ref2 = _reference(features2, w_t, b)
    assert out2.shape == (batch2, num_classes)
    assert jnp.allclose(out2, ref2, atol=1e-2, rtol=1e-2), (
        float(jnp.max(jnp.abs(out2 - ref2))))

    # --- return_embeddings=True path (identity, no kernel needed) ------------
    emb = jax.block_until_ready(
        linear_classifier_forward(features, w_packed, b_packed,
                                  num_classes=num_classes, return_embeddings=True))
    assert emb.shape == features.shape
    assert jnp.array_equal(emb, features)

    print("KERNEL_OK")
</pallas_src>

<mosaic_0001>
module attributes {stable_mosaic.version = 11 : i64} {
  func.func @_linear_kernel(%arg0: i32, %arg1: memref<8x1792xf32, #tpu.memory_space<vmem>>, %arg2: memref<1792x128xbf16, #tpu.memory_space<vmem>>, %arg3: memref<1x128xf32, #tpu.memory_space<vmem>>, %arg4: memref<8x128xbf16, #tpu.memory_space<vmem>>) attributes {dimension_semantics = [#tpu.dimension_semantics<parallel>], iteration_bounds = array<i64: 1>, scalar_prefetch = 0 : i64, scratch_operands = 0 : i64, tpu.core_type = #tpu.core_type<tc>, window_params = [{transform_indices = @transform_0, window_bounds = array<i64: 8, 1792>}, {pipeline_mode = #tpu.pipeline_mode<synchronous>, transform_indices = @transform_1, window_bounds = array<i64: 1792, 128>}, {pipeline_mode = #tpu.pipeline_mode<synchronous>, transform_indices = @transform_2, window_bounds = array<i64: 1, 128>}, {transform_indices = @transform_3, window_bounds = array<i64: 8, 128>}]} {
    %c0 = arith.constant 0 : index
    %c0_0 = arith.constant 0 : index
    %0 = vector.load %arg1[%c0, %c0_0] : memref<8x1792xf32, #tpu.memory_space<vmem>>, vector<8x1792xf32>
    %1 = arith.truncf %0 : vector<8x1792xf32> to vector<8x1792xbf16>
    %c0_1 = arith.constant 0 : index
    %c0_2 = arith.constant 0 : index
    %2 = vector.load %arg2[%c0_1, %c0_2] : memref<1792x128xbf16, #tpu.memory_space<vmem>>, vector<1792x128xbf16>
    %cst = arith.constant dense<0.000000e+00> : vector<8x128xf32>
    %3 = tpu.matmul %1, %2, %cst {dimension_numbers = #tpu.dot_dimension_numbers<[1], [0], [0], [1], [0, 0, 1, 1], [], []>} : vector<8x1792xbf16>, vector<1792x128xbf16>, vector<8x128xf32> -> vector<8x128xf32>
    %c0_3 = arith.constant 0 : index
    %c0_4 = arith.constant 0 : index
    %4 = vector.load %arg3[%c0_3, %c0_4] : memref<1x128xf32, #tpu.memory_space<vmem>>, vector<1x128xf32>
    %5 = vector.broadcast %4 : vector<1x128xf32> to vector<8x128xf32>
    %6 = arith.addf %3, %5 : vector<8x128xf32>
    %7 = arith.truncf %6 : vector<8x128xf32> to vector<8x128xbf16>
    %c0_5 = arith.constant 0 : index
    %c0_6 = arith.constant 0 : index
    %8 = vector.load %arg4[%c0_5, %c0_6] : memref<8x128xbf16, #tpu.memory_space<vmem>>, vector<8x128xbf16>
    tpu.vector_store %arg4[%c0_5, %c0_6], %7 {strides = array<i32>} : memref<8x128xbf16, #tpu.memory_space<vmem>>, vector<8x128xbf16>,
    return
  }
  func.func @transform_0(%arg0: i32) -> (i32, i32) {
    %c0_i32 = arith.constant 0 : i32
    %c0_i32_0 = arith.constant 0 : i32
    return %arg0, %c0_i32 : i32, i32
  }
  func.func @transform_1(%arg0: i32) -> (i32, i32) {
    %c0_i32 = arith.constant 0 : i32
    %c0_i32_0 = arith.constant 0 : i32
    %c0_i32_1 = arith.constant 0 : i32
    return %c0_i32, %c0_i32_0 : i32, i32
  }
  func.func @transform_2(%arg0: i32) -> (i32, i32) {
    %c0_i32 = arith.constant 0 : i32
    %c0_i32_0 = arith.constant 0 : i32
    %c0_i32_1 = arith.constant 0 : i32
    return %c0_i32, %c0_i32_0 : i32, i32
  }
  func.func @transform_3(%arg0: i32) -> (i32, i32) {
    %c0_i32 = arith.constant 0 : i32
    %c0_i32_0 = arith.constant 0 : i32
    return %arg0, %c0_i32 : i32, i32
  }
}

</mosaic_0001>

<llo_original>
// kernel: linear_classifier_forward.1
$region0: #{linear_classifier_forward.1}
  #allocation0 [shape = 'u32[]', space=smem, size = 0x4, offset = 0x4, fixed_abs, tag = 'smem constant byte address 0x4 - core index']
  #allocation1 [shape = 'u32[72,128]{1,0:T(1,128)}', space=vmem, size = 0x9000, scoped, tag = 'internal scratch']
  %s0 = inlined_call_operand.hbm [shape: f32[8,1792], index: 0, kind: input, shape index: {}]
  %s1 = inlined_call_operand.hbm [shape: bf16[1792,128], index: 1, kind: input, shape index: {}]
  %s2 = inlined_call_operand.vmem [shape: f32[1,128], index: 2, kind: input, shape index: {}]
  %s3 = inlined_call_operand.vmem [shape: bf16[8,128], index: 3, kind: output, shape index: {}]
  %s4 = sld [smem:[#allocation0]]
  $region30: #{linear_classifier_forward.1} parent=0
    _
  %s6 = ssub.s32 1, %s4
  %s7 = scalar_select 0, %s6, %s4
  $region1: #{linear_classifier_forward.1} parent=0
    #allocation2 [shape = 'u8[57344]{0}', space=vmem, size = 0xe000, scoped, tag = 'input window, operand 0, single buffered']
    #allocation3 [shape = 's32[1]{0}', space=sflag, size = 0x4, scoped, tag = 'scoped memory for linear_classifier_forward.1']
    #allocation4 [shape = 'u8[458752]{0}', space=vmem, size = 0x70000, scoped, tag = 'input window, operand 1, single buffered']
    #allocation5 [shape = 's32[1]{0}', space=sflag, size = 0x4, scoped, tag = 'scoped memory for linear_classifier_forward.1']
    %8 = vsyncpa [#allocation3], 0
    %9 = vsyncpa [#allocation5], 0
    // Predicated region
    $region2: #{linear_classifier_forward.1} parent=1 // pred_check
      _
    $region3: #{linear_classifier_forward.1} parent=1 // pred_check_branch
      %11 = sbr.rel (0) target = $region5
    $region4: #{linear_classifier_forward.1} parent=1 // pred_region
      %13 = vsyncadd [#allocation3], 0
      %s15 = sshll.u32 %s0, 4
      %s16 = int_to_ptr.hbm [resolvable:$true] %s15
      %s17 = sshll.u32 [#allocation2], 4
      %s18 = int_to_ptr.vmem [resolvable:$true] %s17
      %20 = dma.hbm_to_vmem [thread:$0]  %s16, 1792, %s18, [#allocation3]
    $region5: #{linear_classifier_forward.1} parent=1 // pred_fallthru
      _
    // Predicated region
    $region6: #{linear_classifier_forward.1} parent=1 // pred_check
      _
    $region7: #{linear_classifier_forward.1} parent=1 // pred_check_branch
      %22 = sbr.rel (0) target = $region9
    $region8: #{linear_classifier_forward.1} parent=1 // pred_region
      %24 = vsyncadd [#allocation5], 0
      %s25 = sshll.u32 %s1, 4
      %s26 = int_to_ptr.hbm [resolvable:$true] %s25
      %s27 = sshll.u32 [#allocation4], 4
      %s28 = int_to_ptr.vmem [resolvable:$true] %s27
      %33 = dma.hbm_to_vmem [thread:$0]  %s26, 14336, %s28, [#allocation5], 64, 64, 4
    $region9: #{linear_classifier_forward.1} parent=1 // pred_fallthru
      _
    // Predicated region
    $region10: #{linear_classifier_forward.1} parent=1 // pred_check
      _
    $region11: #{linear_classifier_forward.1} parent=1 // pred_check_branch
      %35 = sbr.rel (0) target = $region13
    $region12: #{linear_classifier_forward.1} parent=1 // pred_region
      _
    $region13: #{linear_classifier_forward.1} parent=1 // pred_fallthru
      _
    // Predicated region
    $region14: #{linear_classifier_forward.1} parent=1 // pred_check
      _
    $region15: #{linear_classifier_forward.1} parent=1 // pred_check_branch
      %37 = sbr.rel (0) target = $region17
    $region16: #{linear_classifier_forward.1} parent=1 // pred_region
      %39 = dma.done [#allocation3], 1792
    $region17: #{linear_classifier_forward.1} parent=1 // pred_fallthru
      _
    // Predicated region
    $region18: #{linear_classifier_forward.1} parent=1 // pred_check
      _
    $region19: #{linear_classifier_forward.1} parent=1 // pred_check_branch
      %41 = sbr.rel (0) target = $region21
    $region20: #{linear_classifier_forward.1} parent=1 // pred_region
      %43 = dma.done [#allocation5], 14336
    $region21: #{linear_classifier_forward.1} parent=1 // pred_fallthru
      _
    %v44 = vld [vmem:[#allocation2] sm:$0xff]
    %v45 = vld [vmem:[#allocation2 + $0x8] sm:$0xff]
    %v46 = vld [vmem:[#allocation2 + $0x10] sm:$0xff]
    %v47 = vld [vmem:[#allocation2 + $0x18] sm:$0xff]
    %v48 = vld [vmem:[#allocation2 + $0x20] sm:$0xff]
    %v49 = vld [vmem:[#allocation2 + $0x28] sm:$0xff]
    %v50 = vld [vmem:[#allocation2 + $0x30] sm:$0xff]
    %v51 = vld [vmem:[#allocation2 + $0x38] sm:$0xff]
    %v52 = vld [vmem:[#allocation2 + $0x40] sm:$0xff]
    %v53 = vld [vmem:[#allocation2 + $0x48] sm:$0xff]
    %v54 = vld [vmem:[#allocation2 + $0x50] sm:$0xff]
    %v55 = vld [vmem:[#allocation2 + $0x58] sm:$0xff]
    %v56 = vld [vmem:[#allocation2 + $0x60] sm:$0xff]
    %v57 = vld [vmem:[#allocation2 + $0x68] sm:$0xff]
    %v58 = vpack.c.bf16 %v44, %v44
    %v59 = vpack.c.bf16 %v45, %v45
    %v60 = vpack.c.bf16 %v46, %v46
    %v61 = vpack.c.bf16 %v47, %v47
    %v62 = vpack.c.bf16 %v48, %v48
    %v63 = vpack.c.bf16 %v49, %v49
    %v64 = vpack.c.bf16 %v50, %v50
    %v65 = vpack.c.bf16 %v51, %v51
    %v66 = vpack.c.bf16 %v52, %v52
    %v67 = vpack.c.bf16 %v53, %v53
    %v68 = vpack.c.bf16 %v54, %v54
    %v69 = vpack.c.bf16 %v55, %v55
    %v70 = vpack.c.bf16 %v56, %v56
    %v71 = vpack.c.bf16 %v57, %v57
    %v72 = vld [vmem:[#allocation4] sm:$0xf]
    %v73 = vld [vmem:[#allocation4 + $0x4] sm:$0xf]
    %v74 = vld [vmem:[#allocation4 + $0x8] sm:$0xf]
    %v75 = vld [vmem:[#allocation4 + $0xc] sm:$0xf]
    %v76 = vld [vmem:[#allocation4 + $0x10] sm:$0xf]
    %v77 = vld [vmem:[#allocation4 + $0x14] sm:$0xf]
    %v78 = vld [vmem:[#allocation4 + $0x18] sm:$0xf]
    %v79 = vld [vmem:[#allocation4 + $0x1c] sm:$0xf]
    %v80 = vld [vmem:[#allocation4 + $0x20] sm:$0xf]
    %v81 = vld [vmem:[#allocation4 + $0x24] sm:$0xf]
    %v82 = vld [vmem:[#allocation4 + $0x28] sm:$0xf]
    %v83 = vld [vmem:[#allocation4 + $0x2c] sm:$0xf]
    %v84 = vld [vmem:[#allocation4 + $0x30] sm:$0xf]
    %v85 = vld [vmem:[#allocation4 + $0x34] sm:$0xf]
    %v86 = vld [vmem:[#allocation4 + $0x38] sm:$0xf]
    %v87 = vld [vmem:[#allocation4 + $0x3c] sm:$0xf]
    %v88 = vld [vmem:[#allocation4 + $0x40] sm:$0xf]
    %v89 = vld [vmem:[#allocation4 + $0x44] sm:$0xf]
    %v90 = vld [vmem:[#allocation4 + $0x48] sm:$0xf]
    %v91 = vld [vmem:[#allocation4 + $0x4c] sm:$0xf]
    %v92 = vld [vmem:[#allocation4 + $0x50] sm:$0xf]
    %v93 = vld [vmem:[#allocation4 + $0x54] sm:$0xf]
    %v94 = vld [vmem:[#allocation4 + $0x58] sm:$0xf]
    %v95 = vld [vmem:[#allocation4 + $0x5c] sm:$0xf]
    %v96 = vld [vmem:[#allocation4 + $0x60] sm:$0xf]
    %v97 = vld [vmem:[#allocation4 + $0x64] sm:$0xf]
    %v98 = vld [vmem:[#allocation4 + $0x68] sm:$0xf]
    %v99 = vld [vmem:[#allocation4 + $0x6c] sm:$0xf]
    %v100 = vld [vmem:[#allocation4 + $0x70] sm:$0xf]
    %v101 = vld [vmem:[#allocation4 + $0x74] sm:$0xf]
    %v102 = vld [vmem:[#allocation4 + $0x78] sm:$0xf]
    %v103 = vld [vmem:[#allocation4 + $0x7c] sm:$0xf]
    %v104 = vld [vmem:[#allocation4 + $0x80] sm:$0xf]
    %v105 = vld [vmem:[#allocation4 + $0x84] sm:$0xf]
    %v106 = vld [vmem:[#allocation4 + $0x88] sm:$0xf]
    %v107 = vld [vmem:[#allocation4 + $0x8c] sm:$0xf]
    %v108 = vld [vmem:[#allocation4 + $0x90] sm:$0xf]
    %v109 = vld [vmem:[#allocation4 + $0x94] sm:$0xf]
    %v110 = vld [vmem:[#allocation4 + $0x98] sm:$0xf]
    %v111 = vld [vmem:[#allocation4 + $0x9c] sm:$0xf]
    %v112 = vld [vmem:[#allocation4 + $0xa0] sm:$0xf]
    %v113 = vld [vmem:[#allocation4 + $0xa4] sm:$0xf]
    %v114 = vld [vmem:[#allocation4 + $0xa8] sm:$0xf]
    %v115 = vld [vmem:[#allocation4 + $0xac] sm:$0xf]
    %v116 = vld [vmem:[#allocation4 + $0xb0] sm:$0xf]
    %v117 = vld [vmem:[#allocation4 + $0xb4] sm:$0xf]
    %v118 = vld [vmem:[#allocation4 + $0xb8] sm:$0xf]
    %v119 = vld [vmem:[#allocation4 + $0xbc] sm:$0xf]
    %v120 = vld [vmem:[#allocation4 + $0xc0] sm:$0xf]
    %v121 = vld [vmem:[#allocation4 + $0xc4] sm:$0xf]
    %v122 = vld [vmem:[#allocation4 + $0xc8] sm:$0xf]
    %v123 = vld [vmem:[#allocation4 + $0xcc] sm:$0xf]
    %v124 = vld [vmem:[#allocation4 + $0xd0] sm:$0xf]
    %v125 = vld [vmem:[#allocation4 + $0xd4] sm:$0xf]
    %v126 = vld [vmem:[#allocation4 + $0xd8] sm:$0xf]
    %v127 = vld [vmem:[#allocation4 + $0xdc] sm:$0xf]
    %v128 = vld [vmem:[#allocation4 + $0xe0] sm:$0xf]
    %v129 = vld [vmem:[#allocation4 + $0xe4] sm:$0xf]
    %v130 = vld [vmem:[#allocation4 + $0xe8] sm:$0xf]
    %v131 = vld [vmem:[#allocation4 + $0xec] sm:$0xf]
    %v132 = vld [vmem:[#allocation4 + $0xf0] sm:$0xf]
    %v133 = vld [vmem:[#allocation4 + $0xf4] sm:$0xf]
    %v134 = vld [vmem:[#allocation4 + $0xf8] sm:$0xf]
    %v135 = vld [vmem:[#allocation4 + $0xfc] sm:$0xf]
    %v136 = vld [vmem:[#allocation4 + $0x100] sm:$0xf]
    %v137 = vld [vmem:[#allocation4 + $0x104] sm:$0xf]
    %v138 = vld [vmem:[#allocation4 + $0x108] sm:$0xf]
    %v139 = vld [vmem:[#allocation4 + $0x10c] sm:$0xf]
    %v140 = vld [vmem:[#allocation4 + $0x110] sm:$0xf]
    %v141 = vld [vmem:[#allocation4 + $0x114] sm:$0xf]
    %v142 = vld [vmem:[#allocation4 + $0x118] sm:$0xf]
    %v143 = vld [vmem:[#allocation4 + $0x11c] sm:$0xf]
    %v144 = vld [vmem:[#allocation4 + $0x120] sm:$0xf]
    %v145 = vld [vmem:[#allocation4 + $0x124] sm:$0xf]
    %v146 = vld [vmem:[#allocation4 + $0x128] sm:$0xf]
    %v147 = vld [vmem:[#allocation4 + $0x12c] sm:$0xf]
    %v148 = vld [vmem:[#allocation4 + $0x130] sm:$0xf]
    %v149 = vld [vmem:[#allocation4 + $0x134] sm:$0xf]
    %v150 = vld [vmem:[#allocation4 + $0x138] sm:$0xf]
    %v151 = vld [vmem:[#allocation4 + $0x13c] sm:$0xf]
    %v152 = vld [vmem:[#allocation4 + $0x140] sm:$0xf]
    %v153 = vld [vmem:[#allocation4 + $0x144] sm:$0xf]
    %v154 = vld [vmem:[#allocation4 + $0x148] sm:$0xf]
    %v155 = vld [vmem:[#allocation4 + $0x14c] sm:$0xf]
    %v156 = vld [vmem:[#allocation4 + $0x150] sm:$0xf]
    %v157 = vld [vmem:[#allocation4 + $0x154] sm:$0xf]
    %v158 = vld [vmem:[#allocation4 + $0x158] sm:$0xf]
    %v159 = vld [vmem:[#allocation4 + $0x15c] sm:$0xf]
    %v160 = vld [vmem:[#allocation4 + $0x160] sm:$0xf]
    %v161 = vld [vmem:[#allocation4 + $0x164] sm:$0xf]
    %v162 = vld [vmem:[#allocation4 + $0x168] sm:$0xf]
    %v163 = vld [vmem:[#allocation4 + $0x16c] sm:$0xf]
    %v164 = vld [vmem:[#allocation4 + $0x170] sm:$0xf]
    %v165 = vld [vmem:[#allocation4 + $0x174] sm:$0xf]
    %v166 = vld [vmem:[#allocation4 + $0x178] sm:$0xf]
    %v167 = vld [vmem:[#allocation4 + $0x17c] sm:$0xf]
    %v168 = vld [vmem:[#allocation4 + $0x180] sm:$0xf]
    %v169 = vld [vmem:[#allocation4 + $0x184] sm:$0xf]
    %v170 = vld [vmem:[#allocation4 + $0x188] sm:$0xf]
    %v171 = vld [vmem:[#allocation4 + $0x18c] sm:$0xf]
    %v172 = vld [vmem:[#allocation4 + $0x190] sm:$0xf]
    %v173 = vld [vmem:[#allocation4 + $0x194] sm:$0xf]
    %v174 = vld [vmem:[#allocation4 + $0x198] sm:$0xf]
    %v175 = vld [vmem:[#allocation4 + $0x19c] sm:$0xf]
    %v176 = vld [vmem:[#allocation4 + $0x1a0] sm:$0xf]
    %v177 = vld [vmem:[#allocation4 + $0x1a4] sm:$0xf]
    %v178 = vld [vmem:[#allocation4 + $0x1a8] sm:$0xf]
    %v179 = vld [vmem:[#allocation4 + $0x1ac] sm:$0xf]
    %v180 = vld [vmem:[#allocation4 + $0x1b0] sm:$0xf]
    %v181 = vld [vmem:[#allocation4 + $0x1b4] sm:$0xf]
    %v182 = vld [vmem:[#allocation4 + $0x1b8] sm:$0xf]
    %v183 = vld [vmem:[#allocation4 + $0x1bc] sm:$0xf]
    %v184 = vld [vmem:[#allocation4 + $0x1c0] sm:$0xf]
    %v185 = vld [vmem:[#allocation4 + $0x1c4] sm:$0xf]
    %v186 = vld [vmem:[#allocation4 + $0x1c8] sm:$0xf]
    %v187 = vld [vmem:[#allocation4 + $0x1cc] sm:$0xf]
    %v188 = vld [vmem:[#allocation4 + $0x1d0] sm:$0xf]
    %v189 = vld [vmem:[#allocation4 + $0x1d4] sm:$0xf]
    %v190 = vld [vmem:[#allocation4 + $0x1d8] sm:$0xf]
    %v191 = vld [vmem:[#allocation4 + $0x1dc] sm:$0xf]
    %v192 = vld [vmem:[#allocation4 + $0x1e0] sm:$0xf]
    %v193 = vld [vmem:[#allocation4 + $0x1e4] sm:$0xf]
    %v194 = vld [vmem:[#allocation4 + $0x1e8] sm:$0xf]
    %v195 = vld [vmem:[#allocation4 + $0x1ec] sm:$0xf]
    %v196 = vld [vmem:[#allocation4 + $0x1f0] sm:$0xf]
    %v197 = vld [vmem:[#allocation4 + $0x1f4] sm:$0xf]
    %v198 = vld [vmem:[#allocation4 + $0x1f8] sm:$0xf]
    %v199 = vld [vmem:[#allocation4 + $0x1fc] sm:$0xf]
    %v200 = vld [vmem:[#allocation4 + $0x200] sm:$0xf]
    %v201 = vld [vmem:[#allocation4 + $0x204] sm:$0xf]
    %v202 = vld [vmem:[#allocation4 + $0x208] sm:$0xf]
    %v203 = vld [vmem:[#allocation4 + $0x20c] sm:$0xf]
    %v204 = vld [vmem:[#allocation4 + $0x210] sm:$0xf]
    %v205 = vld [vmem:[#allocation4 + $0x214] sm:$0xf]
    %v206 = vld [vmem:[#allocation4 + $0x218] sm:$0xf]
    %v207 = vld [vmem:[#allocation4 + $0x21c] sm:$0xf]
    %v208 = vld [vmem:[#allocation4 + $0x220] sm:$0xf]
    %v209 = vld [vmem:[#allocation4 + $0x224] sm:$0xf]
    %v210 = vld [vmem:[#allocation4 + $0x228] sm:$0xf]
    %v211 = vld [vmem:[#allocation4 + $0x22c] sm:$0xf]
    %v212 = vld [vmem:[#allocation4 + $0x230] sm:$0xf]
    %v213 = vld [vmem:[#allocation4 + $0x234] sm:$0xf]
    %v214 = vld [vmem:[#allocation4 + $0x238] sm:$0xf]
    %v215 = vld [vmem:[#allocation4 + $0x23c] sm:$0xf]
    %v216 = vld [vmem:[#allocation4 + $0x240] sm:$0xf]
    %v217 = vld [vmem:[#allocation4 + $0x244] sm:$0xf]
    %v218 = vld [vmem:[#allocation4 + $0x248] sm:$0xf]
    %v219 = vld [vmem:[#allocation4 + $0x24c] sm:$0xf]
    %v220 = vld [vmem:[#allocation4 + $0x250] sm:$0xf]
    %v221 = vld [vmem:[#allocation4 + $0x254] sm:$0xf]
    %v222 = vld [vmem:[#allocation4 + $0x258] sm:$0xf]
    %v223 = vld [vmem:[#allocation4 + $0x25c] sm:$0xf]
    %v224 = vld [vmem:[#allocation4 + $0x260] sm:$0xf]
    %v225 = vld [vmem:[#allocation4 + $0x264] sm:$0xf]
    %v226 = vld [vmem:[#allocation4 + $0x268] sm:$0xf]
    %v227 = vld [vmem:[#allocation4 + $0x26c] sm:$0xf]
    %v228 = vld [vmem:[#allocation4 + $0x270] sm:$0xf]
    %v229 = vld [vmem:[#allocation4 + $0x274] sm:$0xf]
    %v230 = vld [vmem:[#allocation4 + $0x278] sm:$0xf]
    %v231 = vld [vmem:[#allocation4 + $0x27c] sm:$0xf]
    %v232 = vld [vmem:[#allocation4 + $0x280] sm:$0xf]
    %v233 = vld [vmem:[#allocation4 + $0x284] sm:$0xf]
    %v234 = vld [vmem:[#allocation4 + $0x288] sm:$0xf]
    %v235 = vld [vmem:[#allocation4 + $0x28c] sm:$0xf]
    %v236 = vld [vmem:[#allocation4 + $0x290] sm:$0xf]
    %v237 = vld [vmem:[#allocation4 + $0x294] sm:$0xf]
    %v238 = vld [vmem:[#allocation4 + $0x298] sm:$0xf]
    %v239 = vld [vmem:[#allocation4 + $0x29c] sm:$0xf]
    %v240 = vld [vmem:[#allocation4 + $0x2a0] sm:$0xf]
    %v241 = vld [vmem:[#allocation4 + $0x2a4] sm:$0xf]
    %v242 = vld [vmem:[#allocation4 + $0x2a8] sm:$0xf]
    %v243 = vld [vmem:[#allocation4 + $0x2ac] sm:$0xf]
    %v244 = vld [vmem:[#allocation4 + $0x2b0] sm:$0xf]
    %v245 = vld [vmem:[#allocation4 + $0x2b4] sm:$0xf]
    %v246 = vld [vmem:[#allocation4 + $0x2b8] sm:$0xf]
    %v247 = vld [vmem:[#allocation4 + $0x2bc] sm:$0xf]
    %v248 = vld [vmem:[#allocation4 + $0x2c0] sm:$0xf]
    %v249 = vld [vmem:[#allocation4 + $0x2c4] sm:$0xf]
    %v250 = vld [vmem:[#allocation4 + $0x2c8] sm:$0xf]
    %v251 = vld [vmem:[#allocation4 + $0x2cc] sm:$0xf]
    %v252 = vld [vmem:[#allocation4 + $0x2d0] sm:$0xf]
    %v253 = vld [vmem:[#allocation4 + $0x2d4] sm:$0xf]
    %v254 = vld [vmem:[#allocation4 + $0x2d8] sm:$0xf]
    %v255 = vld [vmem:[#allocation4 + $0x2dc] sm:$0xf]
    %v256 = vld [vmem:[#allocation4 + $0x2e0] sm:$0xf]
    %v257 = vld [vmem:[#allocation4 + $0x2e4] sm:$0xf]
    %v258 = vld [vmem:[#allocation4 + $0x2e8] sm:$0xf]
    %v259 = vld [vmem:[#allocation4 + $0x2ec] sm:$0xf]
    %v260 = vld [vmem:[#allocation4 + $0x2f0] sm:$0xf]
    %v261 = vld [vmem:[#allocation4 + $0x2f4] sm:$0xf]
    %v262 = vld [vmem:[#allocation4 + $0x2f8] sm:$0xf]
    %v263 = vld [vmem:[#allocation4 + $0x2fc] sm:$0xf]
    %v264 = vld [vmem:[#allocation4 + $0x300] sm:$0xf]
    %v265 = vld [vmem:[#allocation4 + $0x304] sm:$0xf]
    %v266 = vld [vmem:[#allocation4 + $0x308] sm:$0xf]
    %v267 = vld [vmem:[#allocation4 + $0x30c] sm:$0xf]
    %v268 = vld [vmem:[#allocation4 + $0x310] sm:$0xf]
    %v269 = vld [vmem:[#allocation4 + $0x314] sm:$0xf]
    %v270 = vld [vmem:[#allocation4 + $0x318] sm:$0xf]
    %v271 = vld [vmem:[#allocation4 + $0x31c] sm:$0xf]
    %v272 = vld [vmem:[#allocation4 + $0x320] sm:$0xf]
    %v273 = vld [vmem:[#allocation4 + $0x324] sm:$0xf]
    %v274 = vld [vmem:[#allocation4 + $0x328] sm:$0xf]
    %v275 = vld [vmem:[#allocation4 + $0x32c] sm:$0xf]
    %v276 = vld [vmem:[#allocation4 + $0x330] sm:$0xf]
    %v277 = vld [vmem:[#allocation4 + $0x334] sm:$0xf]
    %v278 = vld [vmem:[#allocation4 + $0x338] sm:$0xf]
    %v279 = vld [vmem:[#allocation4 + $0x33c] sm:$0xf]
    %v280 = vld [vmem:[#allocation4 + $0x340] sm:$0xf]
    %v281 = vld [vmem:[#allocation4 + $0x344] sm:$0xf]
    %v282 = vld [vmem:[#allocation4 + $0x348] sm:$0xf]
    %v283 = vld [vmem:[#allocation4 + $0x34c] sm:$0xf]
    %v284 = vld [vmem:[#allocation4 + $0x350] sm:$0xf]
    %v285 = vld [vmem:[#allocation4 + $0x354] sm:$0xf]
    %v286 = vld [vmem:[#allocation4 + $0x358] sm:$0xf]
    %v287 = vld [vmem:[#allocation4 + $0x35c] sm:$0xf]
    %v288 = vld [vmem:[#allocation4 + $0x360] sm:$0xf]
    %v289 = vld [vmem:[#allocation4 + $0x364] sm:$0xf]
    %v290 = vld [vmem:[#allocation4 + $0x368] sm:$0xf]
    %v291 = vld [vmem:[#allocation4 + $0x36c] sm:$0xf]
    %v292 = vld [vmem:[#allocation4 + $0x370] sm:$0xf]
    %v293 = vld [vmem:[#allocation4 + $0x374] sm:$0xf]
    %v294 = vld [vmem:[#allocation4 + $0x378] sm:$0xf]
    %v295 = vld [vmem:[#allocation4 + $0x37c] sm:$0xf]
    %v296 = vld [vmem:[%s2] sm:$0x1]
    %v298 = vperm.slane %v296, 0
    %v524 = vunpack.c.l.b16 %v72
    %v525 = vunpack.c.l.b16 %v73
    %v526 = vunpack.c.l.b16 %v74
    %v527 = vunpack.c.l.b16 %v75
    %v528 = vunpack.c.l.b16 %v76
    %v529 = vunpack.c.l.b16 %v77
    %v530 = vunpack.c.l.b16 %v78
    %v531 = vunpack.c.l.b16 %v79
    %v532 = vunpack.c.l.b16 %v80
    %v533 = vunpack.c.l.b16 %v81
    %v534 = vunpack.c.l.b16 %v82
    %v535 = vunpack.c.l.b16 %v83
    %v536 = vunpack.c.l.b16 %v84
    %v537 = vunpack.c.l.b16 %v85
    %v538 = vunpack.c.l.b16 %v86
    %v539 = vunpack.c.l.b16 %v87
    %v540 = vunpack.c.l.b16 %v88
    %v541 = vunpack.c.l.b16 %v89
    %v542 = vunpack.c.l.b16 %v90
    %v543 = vunpack.c.l.b16 %v91
    %v544 = vunpack.c.l.b16 %v92
    %v545 = vunpack.c.l.b16 %v93
    %v546 = vunpack.c.l.b16 %v94
    %v547 = vunpack.c.l.b16 %v95
    %v548 = vunpack.c.l.b16 %v96
    %v549 = vunpack.c.l.b16 %v97
    %v550 = vunpack.c.l.b16 %v98
    %v551 = vunpack.c.l.b16 %v99
    %v552 = vunpack.c.l.b16 %v100
    %v553 = vunpack.c.l.b16 %v101
    %v554 = vunpack.c.l.b16 %v102
    %v555 = vunpack.c.l.b16 %v103
    %v556 = vunpack.c.l.b16 %v104
    %v557 = vunpack.c.l.b16 %v105
    %v558 = vunpack.c.l.b16 %v106
    %v559 = vunpack.c.l.b16 %v107
    %v560 = vunpack.c.l.b16 %v108
    %v561 = vunpack.c.l.b16 %v109
    %v562 = vunpack.c.l.b16 %v110
    %v563 = vunpack.c.l.b16 %v111
    %v564 = vunpack.c.l.b16 %v112
    %v565 = vunpack.c.l.b16 %v113
    %v566 = vunpack.c.l.b16 %v114
    %v567 = vunpack.c.l.b16 %v115
    %v568 = vunpack.c.l.b16 %v116
    %v569 = vunpack.c.l.b16 %v117
    %v570 = vunpack.c.l.b16 %v118
    %v571 = vunpack.c.l.b16 %v119
    %v572 = vunpack.c.l.b16 %v120
    %v573 = vunpack.c.l.b16 %v121
    %v574 = vunpack.c.l.b16 %v122
    %v575 = vunpack.c.l.b16 %v123
    %v576 = vunpack.c.l.b16 %v124
    %v577 = vunpack.c.l.b16 %v125
    %v578 = vunpack.c.l.b16 %v126
    %v579 = vunpack.c.l.b16 %v127
    %v580 = vunpack.c.l.b16 %v128
    %v581 = vunpack.c.l.b16 %v129
    %v582 = vunpack.c.l.b16 %v130
    %v583 = vunpack.c.l.b16 %v131
    %v584 = vunpack.c.l.b16 %v132
    %v585 = vunpack.c.l.b16 %v133
    %v586 = vunpack.c.l.b16 %v134
    %v587 = vunpack.c.l.b16 %v135
    %v588 = vunpack.c.l.b16 %v136
    %v589 = vunpack.c.l.b16 %v137
    %v590 = vunpack.c.l.b16 %v138
    %v591 = vunpack.c.l.b16 %v139
    %v592 = vunpack.c.l.b16 %v140
    %v593 = vunpack.c.l.b16 %v141
    %v594 = vunpack.c.l.b16 %v142
    %v595 = vunpack.c.l.b16 %v143
    %v596 = vunpack.c.l.b16 %v144
    %v597 = vunpack.c.l.b16 %v145
    %v598 = vunpack.c.l.b16 %v146
    %v599 = vunpack.c.l.b16 %v147
    %v600 = vunpack.c.l.b16 %v148
    %v601 = vunpack.c.l.b16 %v149
    %v602 = vunpack.c.l.b16 %v150
    %v603 = vunpack.c.l.b16 %v151
    %v604 = vunpack.c.l.b16 %v152
    %v605 = vunpack.c.l.b16 %v153
    %v606 = vunpack.c.l.b16 %v154
    %v607 = vunpack.c.l.b16 %v155
    %v608 = vunpack.c.l.b16 %v156
    %v609 = vunpack.c.l.b16 %v157
    %v610 = vunpack.c.l.b16 %v158
    %v611 = vunpack.c.l.b16 %v159
    %v612 = vunpack.c.l.b16 %v160
    %v613 = vunpack.c.l.b16 %v161
    %v614 = vunpack.c.l.b16 %v162
    %v615 = vunpack.c.l.b16 %v163
    %v616 = vunpack.c.l.b16 %v164
    %v617 = vunpack.c.l.b16 %v165
    %v618 = vunpack.c.l.b16 %v166
    %v619 = vunpack.c.l.b16 %v167
    %v620 = vunpack.c.l.b16 %v168
    %v621 = vunpack.c.l.b16 %v169
    %v622 = vunpack.c.l.b16 %v170
    %v623 = vunpack.c.l.b16 %v171
    %v624 = vunpack.c.l.b16 %v172
    %v625 = vunpack.c.l.b16 %v173
    %v626 = vunpack.c.l.b16 %v174
    %v627 = vunpack.c.l.b16 %v175
    %v628 = vunpack.c.l.b16 %v176
    %v629 = vunpack.c.l.b16 %v177
    %v630 = vunpack.c.l.b16 %v178
    %v631 = vunpack.c.l.b16 %v179
    %v632 = vunpack.c.l.b16 %v180
    %v633 = vunpack.c.l.b16 %v181
    %v634 = vunpack.c.l.b16 %v182
    %v635 = vunpack.c.l.b16 %v183
    %v636 = vunpack.c.l.b16 %v184
    %v637 = vunpack.c.l.b16 %v185
    %v638 = vunpack.c.l.b16 %v186
    %v639 = vunpack.c.l.b16 %v187
    %v640 = vunpack.c.l.b16 %v188
    %v641 = vunpack.c.l.b16 %v189
    %v642 = vunpack.c.l.b16 %v190
    %v643 = vunpack.c.l.b16 %v191
    %v644 = vunpack.c.l.b16 %v192
    %v645 = vunpack.c.l.b16 %v193
    %v646 = vunpack.c.l.b16 %v194
    %v647 = vunpack.c.l.b16 %v195
    %v648 = vunpack.c.l.b16 %v196
    %v649 = vunpack.c.l.b16 %v197
    %v650 = vunpack.c.l.b16 %v198
    %v651 = vunpack.c.l.b16 %v199
    %v652 = vunpack.c.l.b16 %v200
    %v653 = vunpack.c.l.b16 %v201
    %v654 = vunpack.c.l.b16 %v202
    %v655 = vunpack.c.l.b16 %v203
    %v656 = vunpack.c.l.b16 %v204
    %v657 = vunpack.c.l.b16 %v205
    %v658 = vunpack.c.l.b16 %v206
    %v659 = vunpack.c.l.b16 %v207
    %v660 = vunpack.c.l.b16 %v208
    %v661 = vunpack.c.l.b16 %v209
    %v662 = vunpack.c.l.b16 %v210
    %v663 = vunpack.c.l.b16 %v211
    %v664 = vunpack.c.l.b16 %v212
    %v665 = vunpack.c.l.b16 %v213
    %v666 = vunpack.c.l.b16 %v214
    %v667 = vunpack.c.l.b16 %v215
    %v668 = vunpack.c.l.b16 %v216
    %v669 = vunpack.c.l.b16 %v217
    %v670 = vunpack.c.l.b16 %v218
    %v671 = vunpack.c.l.b16 %v219
    %v672 = vunpack.c.l.b16 %v220
    %v673 = vunpack.c.l.b16 %v221
    %v674 = vunpack.c.l.b16 %v222
    %v675 = vunpack.c.l.b16 %v223
    %v676 = vunpack.c.l.b16 %v224
    %v677 = vunpack.c.l.b16 %v225
    %v678 = vunpack.c.l.b16 %v226
    %v679 = vunpack.c.l.b16 %v227
    %v680 = vunpack.c.l.b16 %v228
    %v681 = vunpack.c.l.b16 %v229
    %v682 = vunpack.c.l.b16 %v230
    %v683 = vunpack.c.l.b16 %v231
    %v684 = vunpack.c.l.b16 %v232
    %v685 = vunpack.c.l.b16 %v233
    %v686 = vunpack.c.l.b16 %v234
    %v687 = vunpack.c.l.b16 %v235
    %v688 = vunpack.c.l.b16 %v236
    %v689 = vunpack.c.l.b16 %v237
    %v690 = vunpack.c.l.b16 %v238
    %v691 = vunpack.c.l.b16 %v239
    %v692 = vunpack.c.l.b16 %v240
    %v693 = vunpack.c.l.b16 %v241
    %v694 = vunpack.c.l.b16 %v242
    %v695 = vunpack.c.l.b16 %v243
    %v696 = vunpack.c.l.b16 %v244
    %v697 = vunpack.c.l.b16 %v245
    %v698 = vunpack.c.l.b16 %v246
    %v699 = vunpack.c.l.b16 %v247
    %v700 = vunpack.c.l.b16 %v248
    %v701 = vunpack.c.l.b16 %v249
    %v702 = vunpack.c.l.b16 %v250
    %v703 = vunpack.c.l.b16 %v251
    %v704 = vunpack.c.l.b16 %v252
    %v705 = vunpack.c.l.b16 %v253
    %v706 = vunpack.c.l.b16 %v254
    %v707 = vunpack.c.l.b16 %v255
    %v708 = vunpack.c.l.b16 %v256
    %v709 = vunpack.c.l.b16 %v257
    %v710 = vunpack.c.l.b16 %v258
    %v711 = vunpack.c.l.b16 %v259
    %v712 = vunpack.c.l.b16 %v260
    %v713 = vunpack.c.l.b16 %v261
    %v714 = vunpack.c.l.b16 %v262
    %v715 = vunpack.c.l.b16 %v263
    %v716 = vunpack.c.l.b16 %v264
    %v717 = vunpack.c.l.b16 %v265
    %v718 = vunpack.c.l.b16 %v266
    %v719 = vunpack.c.l.b16 %v267
    %v720 = vunpack.c.l.b16 %v268
    %v721 = vunpack.c.l.b16 %v269
    %v722 = vunpack.c.l.b16 %v270
    %v723 = vunpack.c.l.b16 %v271
    %v724 = vunpack.c.l.b16 %v272
    %v725 = vunpack.c.l.b16 %v273
    %v726 = vunpack.c.l.b16 %v274
    %v727 = vunpack.c.l.b16 %v275
    %v728 = vunpack.c.l.b16 %v276
    %v729 = vunpack.c.l.b16 %v277
    %v730 = vunpack.c.l.b16 %v278
    %v731 = vunpack.c.l.b16 %v279
    %v732 = vunpack.c.l.b16 %v280
    %v733 = vunpack.c.l.b16 %v281
    %v734 = vunpack.c.l.b16 %v282
    %v735 = vunpack.c.l.b16 %v283
    %v736 = vunpack.c.l.b16 %v284
    %v737 = vunpack.c.l.b16 %v285
    %v738 = vunpack.c.l.b16 %v286
    %v739 = vunpack.c.l.b16 %v287
    %v740 = vunpack.c.l.b16 %v288
    %v741 = vunpack.c.l.b16 %v289
    %v742 = vunpack.c.l.b16 %v290
    %v743 = vunpack.c.l.b16 %v291
    %v744 = vunpack.c.l.b16 %v292
    %v745 = vunpack.c.l.b16 %v293
    %v746 = vunpack.c.l.b16 %v294
    %v747 = vunpack.c.l.b16 %v295
    %v748 = vpack.c.b16 %v525, %v524
    %v749 = vpack.c.b16 %v527, %v526
    %v750 = vpack.c.b16 %v529, %v528
    %v751 = vpack.c.b16 %v531, %v530
    %v752 = vpack.c.b16 %v533, %v532
    %v753 = vpack.c.b16 %v535, %v534
    %v754 = vpack.c.b16 %v537, %v536
    %v755 = vpack.c.b16 %v539, %v538
    %v756 = vpack.c.b16 %v541, %v540
    %v757 = vpack.c.b16 %v543, %v542
    %v758 = vpack.c.b16 %v545, %v544
    %v759 = vpack.c.b16 %v547, %v546
    %v760 = vpack.c.b16 %v549, %v548
    %v761 = vpack.c.b16 %v551, %v550
    %v762 = vpack.c.b16 %v553, %v552
    %v763 = vpack.c.b16 %v555, %v554
    %v764 = vpack.c.b16 %v557, %v556
    %v765 = vpack.c.b16 %v559, %v558
    %v766 = vpack.c.b16 %v561, %v560
    %v767 = vpack.c.b16 %v563, %v562
    %v768 = vpack.c.b16 %v565, %v564
    %v769 = vpack.c.b16 %v567, %v566
    %v770 = vpack.c.b16 %v569, %v568
    %v771 = vpack.c.b16 %v571, %v570
    %v772 = vpack.c.b16 %v573, %v572
    %v773 = vpack.c.b16 %v575, %v574
    %v774 = vpack.c.b16 %v577, %v576
    %v775 = vpack.c.b16 %v579, %v578
    %v776 = vpack.c.b16 %v581, %v580
    %v777 = vpack.c.b16 %v583, %v582
    %v778 = vpack.c.b16 %v585, %v584
    %v779 = vpack.c.b16 %v587, %v586
    %v780 = vpack.c.b16 %v589, %v588
    %v781 = vpack.c.b16 %v591, %v590
    %v782 = vpack.c.b16 %v593, %v592
    %v783 = vpack.c.b16 %v595, %v594
    %v784 = vpack.c.b16 %v597, %v596
    %v785 = vpack.c.b16 %v599, %v598
    %v786 = vpack.c.b16 %v601, %v600
    %v787 = vpack.c.b16 %v603, %v602
    %v788 = vpack.c.b16 %v605, %v604
    %v789 = vpack.c.b16 %v607, %v606
    %v790 = vpack.c.b16 %v609, %v608
    %v791 = vpack.c.b16 %v611, %v610
    %v792 = vpack.c.b16 %v613, %v612
    %v793 = vpack.c.b16 %v615, %v614
    %v794 = vpack.c.b16 %v617, %v616
    %v795 = vpack.c.b16 %v619, %v618
    %v796 = vpack.c.b16 %v621, %v620
    %v797 = vpack.c.b16 %v623, %v622
    %v798 = vpack.c.b16 %v625, %v624
    %v799 = vpack.c.b16 %v627, %v626
    %v800 = vpack.c.b16 %v629, %v628
    %v801 = vpack.c.b16 %v631, %v630
    %v802 = vpack.c.b16 %v633, %v632
    %v803 = vpack.c.b16 %v635, %v634
    %v804 = vpack.c.b16 %v637, %v636
    %v805 = vpack.c.b16 %v639, %v638
    %v806 = vpack.c.b16 %v641, %v640
    %v807 = vpack.c.b16 %v643, %v642
    %v808 = vpack.c.b16 %v645, %v644
    %v809 = vpack.c.b16 %v647, %v646
    %v810 = vpack.c.b16 %v649, %v648
    %v811 = vpack.c.b16 %v651, %v650
    %v812 = vpack.c.b16 %v653, %v652
    %v813 = vpack.c.b16 %v655, %v654
    %v814 = vpack.c.b16 %v657, %v656
    %v815 = vpack.c.b16 %v659, %v658
    %v816 = vpack.c.b16 %v661, %v660
    %v817 = vpack.c.b16 %v663, %v662
    %v818 = vpack.c.b16 %v665, %v664
    %v819 = vpack.c.b16 %v667, %v666
    %v820 = vpack.c.b16 %v669, %v668
    %v821 = vpack.c.b16 %v671, %v670
    %v822 = vpack.c.b16 %v673, %v672
    %v823 = vpack.c.b16 %v675, %v674
    %v824 = vpack.c.b16 %v677, %v676
    %v825 = vpack.c.b16 %v679, %v678
    %v826 = vpack.c.b16 %v681, %v680
    %v827 = vpack.c.b16 %v683, %v682
    %v828 = vpack.c.b16 %v685, %v684
    %v829 = vpack.c.b16 %v687, %v686
    %v830 = vpack.c.b16 %v689, %v688
    %v831 = vpack.c.b16 %v691, %v690
    %v832 = vpack.c.b16 %v693, %v692
    %v833 = vpack.c.b16 %v695, %v694
    %v834 = vpack.c.b16 %v697, %v696
    %v835 = vpack.c.b16 %v699, %v698
    %v836 = vpack.c.b16 %v701, %v700
    %v837 = vpack.c.b16 %v703, %v702
    %v838 = vpack.c.b16 %v705, %v704
    %v839 = vpack.c.b16 %v707, %v706
    %v840 = vpack.c.b16 %v709, %v708
    %v841 = vpack.c.b16 %v711, %v710
    %v842 = vpack.c.b16 %v713, %v712
    %v843 = vpack.c.b16 %v715, %v714
    %v844 = vpack.c.b16 %v717, %v716
    %v845 = vpack.c.b16 %v719, %v718
    %v846 = vpack.c.b16 %v721, %v720
    %v847 = vpack.c.b16 %v723, %v722
    %v848 = vpack.c.b16 %v725, %v724
    %v849 = vpack.c.b16 %v727, %v726
    %v850 = vpack.c.b16 %v729, %v728
    %v851 = vpack.c.b16 %v731, %v730
    %v852 = vpack.c.b16 %v733, %v732
    %v853 = vpack.c.b16 %v735, %v734
    %v854 = vpack.c.b16 %v737, %v736
    %v855 = vpack.c.b16 %v739, %v738
    %v856 = vpack.c.b16 %v741, %v740
    %v857 = vpack.c.b16 %v743, %v742
    %v858 = vpack.c.b16 %v745, %v744
    %v859 = vpack.c.b16 %v747, %v746
    %972 = vmatpush.bf16.msra.mxu0 %v755
    %973 = vmatpush.bf16.msra.mxu0 %v754
    %974 = vmatpush.bf16.msra.mxu0 %v753
    %975 = vmatpush.bf16.msra.mxu0 %v752
    %976 = vmatpush.bf16.msra.mxu0 %v751
    %977 = vmatpush.bf16.msra.mxu0 %v750
    %978 = vmatpush.bf16.msra.mxu0 %v749
    %979 = vmatpush.bf16.msra.mxu0 %v748
    %980 = vmatmul.bf16.gmra.mxu0 %v58
    %v981 = vpop.f32.mrf.mxu0
    %v982 = vadd.f32 %v298, %v981
    %v983 = vpop.f32.mrf.mxu0
    %984 = vdwg.mxu0
    %985 = vmatpush.bf16.msra.mxu0 %v763
    %986 = vmatpush.bf16.msra.mxu0 %v762
    %987 = vmatpush.bf16.msra.mxu0 %v761
    %988 = vmatpush.bf16.msra.mxu0 %v760
    %989 = vmatpush.bf16.msra.mxu0 %v759
    %990 = vmatpush.bf16.msra.mxu0 %v758
    %991 = vmatpush.bf16.msra.mxu0 %v757
    %992 = vmatpush.bf16.msra.mxu0 %v756
    %993 = vmatmul.bf16.gmra.mxu0 %v59
    %v994 = vpop.f32.mrf.mxu0
    %v995 = vadd.f32 %v982, %v994
    %v996 = vpop.f32.mrf.mxu0
    %997 = vdwg.mxu0
    %998 = vmatpush.bf16.msra.mxu0 %v771
    %999 = vmatpush.bf16.msra.mxu0 %v770
    %1000 = vmatpush.bf16.msra.mxu0 %v769
    %1001 = vmatpush.bf16.msra.mxu0 %v768
    %1002 = vmatpush.bf16.msra.mxu0 %v767
    %1003 = vmatpush.bf16.msra.mxu0 %v766
    %1004 = vmatpush.bf16.msra.mxu0 %v765
    %1005 = vmatpush.bf16.msra.mxu0 %v764
    %1006 = vmatmul.bf16.gmra.mxu0 %v60
    %v1007 = vpop.f32.mrf.mxu0
    %v1008 = vadd.f32 %v995, %v1007
    %v1009 = vpop.f32.mrf.mxu0
    %1010 = vdwg.mxu0
    %1011 = vmatpush.bf16.msra.mxu0 %v779
    %1012 = vmatpush.bf16.msra.mxu0 %v778
    %1013 = vmatpush.bf16.msra.mxu0 %v777
    %1014 = vmatpush.bf16.msra.mxu0 %v776
    %1015 = vmatpush.bf16.msra.mxu0 %v775
    %1016 = vmatpush.bf16.msra.mxu0 %v774
    %1017 = vmatpush.bf16.msra.mxu0 %v773
    %1018 = vmatpush.bf16.msra.mxu0 %v772
    %1019 = vmatmul.bf16.gmra.mxu0 %v61
    %v1020 = vpop.f32.mrf.mxu0
    %v1021 = vadd.f32 %v1008, %v1020
    %v1022 = vpop.f32.mrf.mxu0
    %1023 = vdwg.mxu0
    %1024 = vmatpush.bf16.msra.mxu0 %v787
    %1025 = vmatpush.bf16.msra.mxu0 %v786
    %1026 = vmatpush.bf16.msra.mxu0 %v785
    %1027 = vmatpush.bf16.msra.mxu0 %v784
    %1028 = vmatpush.bf16.msra.mxu0 %v783
    %1029 = vmatpush.bf16.msra.mxu0 %v782
    %1030 = vmatpush.bf16.msra.mxu0 %v781
    %1031 = vmatpush.bf16.msra.mxu0 %v780
    %1032 = vmatmul.bf16.gmra.mxu0 %v62
    %v1033 = vpop.f32.mrf.mxu0
    %v1034 = vadd.f32 %v1021, %v1033
    %v1035 = vpop.f32.mrf.mxu0
    %1036 = vdwg.mxu0
    %1037 = vmatpush.bf16.msra.mxu0 %v795
    %1038 = vmatpush.bf16.msra.mxu0 %v794
    %1039 = vmatpush.bf16.msra.mxu0 %v793
    %1040 = vmatpush.bf16.msra.mxu0 %v792
    %1041 = vmatpush.bf16.msra.mxu0 %v791
    %1042 = vmatpush.bf16.msra.mxu0 %v790
    %1043 = vmatpush.bf16.msra.mxu0 %v789
    %1044 = vmatpush.bf16.msra.mxu0 %v788
    %1045 = vmatmul.bf16.gmra.mxu0 %v63
    %v1046 = vpop.f32.mrf.mxu0
    %v1047 = vadd.f32 %v1034, %v1046
    %v1048 = vpop.f32.mrf.mxu0
    %1049 = vdwg.mxu0
    %1050 = vmatpush.bf16.msra.mxu0 %v803
    %1051 = vmatpush.bf16.msra.mxu0 %v802
    %1052 = vmatpush.bf16.msra.mxu0 %v801
    %1053 = vmatpush.bf16.msra.mxu0 %v800
    %1054 = vmatpush.bf16.msra.mxu0 %v799
    %1055 = vmatpush.bf16.msra.mxu0 %v798
    %1056 = vmatpush.bf16.msra.mxu0 %v797
    %1057 = vmatpush.bf16.msra.mxu0 %v796
    %1058 = vmatmul.bf16.gmra.mxu0 %v64
    %v1059 = vpop.f32.mrf.mxu0
    %v1060 = vadd.f32 %v1047, %v1059
    %v1061 = vpop.f32.mrf.mxu0
    %1062 = vdwg.mxu0
    %1063 = vmatpush.bf16.msra.mxu0 %v811
    %1064 = vmatpush.bf16.msra.mxu0 %v810
    %1065 = vmatpush.bf16.msra.mxu0 %v809
    %1066 = vmatpush.bf16.msra.mxu0 %v808
    %1067 = vmatpush.bf16.msra.mxu0 %v807
    %1068 = vmatpush.bf16.msra.mxu0 %v806
    %1069 = vmatpush.bf16.msra.mxu0 %v805
    %1070 = vmatpush.bf16.msra.mxu0 %v804
    %1071 = vmatmul.bf16.gmra.mxu0 %v65
    %v1072 = vpop.f32.mrf.mxu0
    %v1073 = vadd.f32 %v1060, %v1072
    %v1074 = vpop.f32.mrf.mxu0
    %1075 = vdwg.mxu0
    %1076 = vmatpush.bf16.msra.mxu0 %v819
    %1077 = vmatpush.bf16.msra.mxu0 %v818
    %1078 = vmatpush.bf16.msra.mxu0 %v817
    %1079 = vmatpush.bf16.msra.mxu0 %v816
    %1080 = vmatpush.bf16.msra.mxu0 %v815
    %1081 = vmatpush.bf16.msra.mxu0 %v814
    %1082 = vmatpush.bf16.msra.mxu0 %v813
    %1083 = vmatpush.bf16.msra.mxu0 %v812
    %1084 = vmatmul.bf16.gmra.mxu0 %v66
    %v1085 = vpop.f32.mrf.mxu0
    %v1086 = vadd.f32 %v1073, %v1085
    %v1087 = vpop.f32.mrf.mxu0
    %1088 = vdwg.mxu0
    %1089 = vmatpush.bf16.msra.mxu0 %v827
    %1090 = vmatpush.bf16.msra.mxu0 %v826
    %1091 = vmatpush.bf16.msra.mxu0 %v825
    %1092 = vmatpush.bf16.msra.mxu0 %v824
    %1093 = vmatpush.bf16.msra.mxu0 %v823
    %1094 = vmatpush.bf16.msra.mxu0 %v822
    %1095 = vmatpush.bf16.msra.mxu0 %v821
    %1096 = vmatpush.bf16.msra.mxu0 %v820
    %1097 = vmatmul.bf16.gmra.mxu0 %v67
    %v1098 = vpop.f32.mrf.mxu0
    %v1099 = vadd.f32 %v1086, %v1098
    %v1100 = vpop.f32.mrf.mxu0
    %1101 = vdwg.mxu0
    %1102 = vmatpush.bf16.msra.mxu0 %v835
    %1103 = vmatpush.bf16.msra.mxu0 %v834
    %1104 = vmatpush.bf16.msra.mxu0 %v833
    %1105 = vmatpush.bf16.msra.mxu0 %v832
    %1106 = vmatpush.bf16.msra.mxu0 %v831
    %1107 = vmatpush.bf16.msra.mxu0 %v830
    %1108 = vmatpush.bf16.msra.mxu0 %v829
    %1109 = vmatpush.bf16.msra.mxu0 %v828
    %1110 = vmatmul.bf16.gmra.mxu0 %v68
    %v1111 = vpop.f32.mrf.mxu0
    %v1112 = vadd.f32 %v1099, %v1111
    %v1113 = vpop.f32.mrf.mxu0
    %1114 = vdwg.mxu0
    %1115 = vmatpush.bf16.msra.mxu0 %v843
    %1116 = vmatpush.bf16.msra.mxu0 %v842
    %1117 = vmatpush.bf16.msra.mxu0 %v841
    %1118 = vmatpush.bf16.msra.mxu0 %v840
    %1119 = vmatpush.bf16.msra.mxu0 %v839
    %1120 = vmatpush.bf16.msra.mxu0 %v838
    %1121 = vmatpush.bf16.msra.mxu0 %v837
    %1122 = vmatpush.bf16.msra.mxu0 %v836
    %1123 = vmatmul.bf16.gmra.mxu0 %v69
    %v1124 = vpop.f32.mrf.mxu0
    %v1125 = vadd.f32 %v1112, %v1124
    %v1126 = vpop.f32.mrf.mxu0
    %1127 = vdwg.mxu0
    %1128 = vmatpush.bf16.msra.mxu0 %v851
    %1129 = vmatpush.bf16.msra.mxu0 %v850
    %1130 = vmatpush.bf16.msra.mxu0 %v849
    %1131 = vmatpush.bf16.msra.mxu0 %v848
    %1132 = vmatpush.bf16.msra.mxu0 %v847
    %1133 = vmatpush.bf16.msra.mxu0 %v846
    %1134 = vmatpush.bf16.msra.mxu0 %v845
    %1135 = vmatpush.bf16.msra.mxu0 %v844
    %1136 = vmatmul.bf16.gmra.mxu0 %v70
    %v1137 = vpop.f32.mrf.mxu0
    %v1138 = vadd.f32 %v1125, %v1137
    %v1139 = vpop.f32.mrf.mxu0
    %1140 = vdwg.mxu0
    %1141 = vmatpush.bf16.msra.mxu0 %v859
    %1142 = vmatpush.bf16.msra.mxu0 %v858
    %1143 = vmatpush.bf16.msra.mxu0 %v857
    %1144 = vmatpush.bf16.msra.mxu0 %v856
    %1145 = vmatpush.bf16.msra.mxu0 %v855
    %1146 = vmatpush.bf16.msra.mxu0 %v854
    %1147 = vmatpush.bf16.msra.mxu0 %v853
    %1148 = vmatpush.bf16.msra.mxu0 %v852
    %1149 = vmatmul.bf16.gmra.mxu0 %v71
    %v1150 = vpop.f32.mrf.mxu0
    %v1151 = vadd.f32 %v1138, %v1150
    %v1152 = vpop.f32.mrf.mxu0
    %1153 = vdwg.mxu0
    %v1154 = vpack.c.bf16 %v1151, %v1151
    %1155 = vst [vmem:[%s3] sm:$0xf] %v1154
    // Predicated region
    $region22: #{linear_classifier_forward.1} parent=1 // pred_check
      _
    $region23: #{linear_classifier_forward.1} parent=1 // pred_check_branch
      %1157 = sbr.rel (0) target = $region25
    $region24: #{linear_classifier_forward.1} parent=1 // pred_region
      _
    $region25: #{linear_classifier_forward.1} parent=1 // pred_fallthru
      _
    // Predicated region
    $region26: #{linear_classifier_forward.1} parent=1 // pred_check
      _
    $region27: #{linear_classifier_forward.1} parent=1 // pred_check_branch
      %1159 = sbr.rel (0) target = $region29
    $region28: #{linear_classifier_forward.1} parent=1 // pred_region
      _
    $region29: #{linear_classifier_forward.1} parent=1 // pred_fallthru
      _
    %1160 = vsyncpa [#allocation3], 1
    %1161 = vsyncpa [#allocation5], 1

</llo_original>
